<compile_context>
chip_gen: v6e
topology: v6e:2x2x1
jax: 0.10.0
libtpu: 0.0.40
codegen_flags: <defaults>
</compile_context>

<pallas_src>
import jax
import jax.numpy as jnp
import numpy as np
from jax.experimental import pallas as pl
from jax.experimental.pallas import tpu as pltpu

_LANE = 128


# --------------------------- generation-aware sizing --------------------------

def _detect_tpu_generation():
    try:
        kind = jax.devices()[0].device_kind.lower()
    except Exception:
        return "unknown"
    if "v5 lite" in kind or "v5lite" in kind or "v5e" in kind:
        return "v5e"
    if "v6" in kind:
        return "v6e"
    if "v7" in kind or "7x" in kind:
        return "v7x"
    return "unknown"


_GEN = _detect_tpu_generation()
# Input bytes per grid step needed to amortize the ~0.35 us/step overhead,
# scaled with each generation's HBM bandwidth.
_TARGET_STEP_BYTES = {"v5e": 320 << 10, "v6e": 512 << 10,
                      "v7x": 1152 << 10}.get(_GEN, 512 << 10)
# Per-step input-tile VMEM budget (double-buffered by the pipeline).
_VMEM_STEP_BUDGET = {"v5e": 6 << 20, "v6e": 10 << 20,
                     "v7x": 10 << 20}.get(_GEN, 8 << 20)


def _plan_batch_tiles(batch, row_bytes):
    """Pick (padded_batch, block_rows).

    block_rows targets >= _TARGET_STEP_BYTES of input DMA per grid step,
    capped by _VMEM_STEP_BUDGET, and is a multiple of 128 (lane width of the
    lane-major outputs) whenever the batch is gridded.  Small batches use a
    single whole-batch block (block == full array dims, so the (8,128) rule
    is satisfied without padding).
    """
    row_bytes = max(1, int(row_bytes))
    rows = -(-_TARGET_STEP_BYTES // row_bytes)            # ceil to hit target
    cap = max(_LANE, _VMEM_STEP_BUDGET // row_bytes)      # VMEM cap per step
    rows = max(_LANE, min(rows, cap))
    bt = ((rows + _LANE - 1) // _LANE) * _LANE
    if batch <= bt:
        return batch, batch                               # single block
    steps = -(-batch // bt)
    bt = ((-(-batch // steps) + _LANE - 1) // _LANE) * _LANE   # balanced split
    return steps * bt, bt


def _vmem_limit_bytes(step_input_bytes):
    # double-buffered input tiles + weights/outputs + headroom; also lifts the
    # 16 MiB v5e default, stays well under v7x's 64 MiB physical VMEM.
    need = 2 * int(step_input_bytes) + (4 << 20)
    return int(min(max(need, 32 << 20), 48 << 20))


def _pad_batch(x, padded_rows):
    rows = x.shape[0]
    if padded_rows == rows:
        return x
    return jnp.pad(x, ((0, padded_rows - rows), (0, 0)))


# ------------------------------ kernel helpers --------------------------------

def _bce_with_logits(x, y):
    # Numerically stable BCEWithLogitsLoss(reduction='none'); matches PyTorch:
    #   max(x, 0) - x*y + log1p(exp(-|x|))
    return jnp.maximum(x, 0.0) - x * y + jnp.log1p(jnp.exp(-jnp.abs(x)))


def _row_logits(s_ref, a_ref, ns_ref, ws_ref, wa_ref, wns_ref, b_ref):
    # VPU multiply + lane (XLU) reduction instead of an N=1 MXU matmul.
    # Inputs may be bf16; upcast after load (kernel reads the narrow dtype
    # straight from HBM -> half the DMA bytes for bf16 callers).
    s = s_ref[...].astype(jnp.float32)
    a = a_ref[...].astype(jnp.float32)
    ns = ns_ref[...].astype(jnp.float32)
    return (jnp.sum(s * ws_ref[...], axis=-1)
            + jnp.sum(a * wa_ref[...], axis=-1)
            + jnp.sum(ns * wns_ref[...], axis=-1)
            + b_ref[0])                                            # [Bt]


# ------------------------------ kernels ---------------------------------------

def _logits_kernel(s_ref, a_ref, ns_ref, ws_ref, wa_ref, wns_ref, b_ref, o_ref):
    # forward only: o:[1, Bt] lane-major logits
    o_ref[...] = _row_logits(s_ref, a_ref, ns_ref,
                             ws_ref, wa_ref, wns_ref, b_ref)[None, :]


def _fwd_bce_kernel(s_ref, a_ref, ns_ref, ws_ref, wa_ref, wns_ref, b_ref,
                    y_ref, o_ref):
    # fused forward + BCEWithLogits against SMEM scalar label y
    logit = _row_logits(s_ref, a_ref, ns_ref, ws_ref, wa_ref, wns_ref, b_ref)
    o_ref[...] = _bce_with_logits(logit, y_ref[0])[None, :]        # [1, Bt]


def _bce_only_kernel(x_ref, y_ref, o_ref):
    # standalone gan_loss on precomputed logits, single lane-major block
    o_ref[...] = _bce_with_logits(x_ref[...].astype(jnp.float32), y_ref[0])


def _d_loss_kernel(s_ref, a_ref, ns_ref, pns_ref,
                   ws_ref, wa_ref, wns_ref, b_ref, o_ref):
    # Both forwards fused; shared states/actions partial logit computed once.
    # Emits per-example partials (no SMEM accumulator -> grid stays parallel):
    #   o[0, :] = BCE(logit_gen, 1) + BCE(logit_true, 0)
    #   o[1, :] = (logit_gen > 0.5) + (logit_true < 0.5)
    s = s_ref[...].astype(jnp.float32)
    a = a_ref[...].astype(jnp.float32)
    ns = ns_ref[...].astype(jnp.float32)
    pns = pns_ref[...].astype(jnp.float32)

    shared = (jnp.sum(s * ws_ref[...], axis=-1)
              + jnp.sum(a * wa_ref[...], axis=-1)
              + b_ref[0])                                          # [Bt]
    wns = wns_ref[...]
    lt = shared + jnp.sum(ns * wns, axis=-1)                       # logits_true
    lg = shared + jnp.sum(pns * wns, axis=-1)                      # logits_gen

    loss = _bce_with_logits(lg, 1.0) + _bce_with_logits(lt, 0.0)
    # NOTE: thresholds RAW logits at 0.5 -- faithful to the torch source's
    # torch.gt(logits_gen, 0.5) / torch.lt(logits_true, 0.5).
    correct = (lg > 0.5).astype(jnp.float32) + (lt < 0.5).astype(jnp.float32)

    o_ref[...] = jnp.concatenate([loss[None, :], correct[None, :]], axis=0)


# ------------------------------ wrappers --------------------------------------

def _weight_specs(S, A):
    return [
        pl.BlockSpec((1, S), lambda i: (0, 0)),                       # w_s
        pl.BlockSpec((1, A), lambda i: (0, 0)),                       # w_a
        pl.BlockSpec((1, S), lambda i: (0, 0)),                       # w_ns
        pl.BlockSpec((1,), lambda i: (0,),
                     memory_space=pltpu.MemorySpace.SMEM),            # bias
    ]


def _smem_scalar_spec():
    return pl.BlockSpec((1,), lambda i: (0,),
                        memory_space=pltpu.MemorySpace.SMEM)


def _fused_forward(states, actions, next_states, ws, wa, wns, b, label=None):
    """One pallas_call: logits [1,B] if label is None, else BCE losses [1,B]."""
    B, S = states.shape
    A = actions.shape[1]
    row_bytes = (states.dtype.itemsize * S + actions.dtype.itemsize * A
                 + next_states.dtype.itemsize * S)
    b_pad, Bt = _plan_batch_tiles(B, row_bytes)

    s_p = _pad_batch(states, b_pad)
    a_p = _pad_batch(actions, b_pad)
    ns_p = _pad_batch(next_states, b_pad)

    data_specs = [
        pl.BlockSpec((Bt, S), lambda i: (i, 0)),
        pl.BlockSpec((Bt, A), lambda i: (i, 0)),
        pl.BlockSpec((Bt, S), lambda i: (i, 0)),
    ]
    in_specs = data_specs + _weight_specs(S, A)
    args = [s_p, a_p, ns_p, ws, wa, wns, b]
    if label is None:
        kernel = _logits_kernel
    else:
        kernel = _fwd_bce_kernel
        in_specs = in_specs + [_smem_scalar_spec()]
        args.append(jnp.asarray(label, jnp.float32).reshape(1))

    out = pl.pallas_call(
        kernel,
        out_shape=jax.ShapeDtypeStruct((1, b_pad), jnp.float32),
        grid=(b_pad // Bt,),
        in_specs=in_specs,
        out_specs=pl.BlockSpec((1, Bt), lambda i: (0, i)),
        compiler_params=pltpu.CompilerParams(
            dimension_semantics=("parallel",),
            vmem_limit_bytes=_vmem_limit_bytes(Bt * row_bytes)),
    )(*args)
    return out[:, :B]


def _pallas_bce(logits_row, label):
    """Standalone gan_loss on precomputed logits (lane-major [1, B]).

    Single whole-array block: a [1,B] f32 tile is tiny, a grid would be pure
    per-step overhead.
    """
    B = logits_row.shape[-1]
    return pl.pallas_call(
        _bce_only_kernel,
        out_shape=jax.ShapeDtypeStruct((1, B), jnp.float32),
        in_specs=[pl.BlockSpec(memory_space=pltpu.MemorySpace.VMEM),
                  pl.BlockSpec(memory_space=pltpu.MemorySpace.SMEM)],
        out_specs=pl.BlockSpec(memory_space=pltpu.MemorySpace.VMEM),
    )(logits_row, jnp.asarray(label, jnp.float32).reshape(1))


def _pallas_d_loss_stats(states, actions, next_states, pred_next_states,
                         ws, wa, wns, b):
    """One pallas_call: both forwards + per-example partials; scalar combine
    (the two means) is done on the sliced [2, B] result in the wrapper."""
    B, S = states.shape
    A = actions.shape[1]
    row_bytes = (states.dtype.itemsize * S + actions.dtype.itemsize * A
                 + next_states.dtype.itemsize * S
                 + pred_next_states.dtype.itemsize * S)
    b_pad, Bt = _plan_batch_tiles(B, row_bytes)

    s_p = _pad_batch(states, b_pad)
    a_p = _pad_batch(actions, b_pad)
    ns_p = _pad_batch(next_states, b_pad)
    pns_p = _pad_batch(pred_next_states, b_pad)

    data_specs = [
        pl.BlockSpec((Bt, S), lambda i: (i, 0)),
        pl.BlockSpec((Bt, A), lambda i: (i, 0)),
        pl.BlockSpec((Bt, S), lambda i: (i, 0)),
        pl.BlockSpec((Bt, S), lambda i: (i, 0)),
    ]
    out = pl.pallas_call(
        _d_loss_kernel,
        out_shape=jax.ShapeDtypeStruct((2, b_pad), jnp.float32),
        grid=(b_pad // Bt,),
        in_specs=data_specs + _weight_specs(S, A),
        out_specs=pl.BlockSpec((2, Bt), lambda i: (0, i)),
        compiler_params=pltpu.CompilerParams(
            dimension_semantics=("parallel",),      # no accumulator -> 2 TCs ok
            vmem_limit_bytes=_vmem_limit_bytes(Bt * row_bytes)),
    )(s_p, a_p, ns_p, pns_p, ws, wa, wns, b)

    valid = out[:, :B]                              # drop padded tail rows
    inv_b = 1.0 / float(B)
    loss = jnp.sum(valid[0]) * inv_b                # mean_gen + mean_true
    fraction_correct = jnp.sum(valid[1]) * inv_b
    return loss, fraction_correct


# ------------------------------ module port -----------------------------------

class Discriminator:
    """JAX/Pallas port of the PyTorch Discriminator base class.

    Notes:
      * The torch base class leaves `forward` abstract.  A deterministic linear
        head logit = [states|actions|next_states] @ W + b is supplied so the
        gan_loss / utility / loss / d_loss pipeline is runnable end-to-end.
      * `device` argument is dropped (JAX manages placement).
      * Hot paths (utility/loss, d_loss) each run as a single fused Pallas
        kernel; forward()/gan_loss() are kept for API compatibility.
    """

    def __init__(self, threshold, state_dim, action_dim, key):
        self.threshold = threshold
        in_dim = 2 * state_dim + action_dim
        w = jax.random.normal(key, (in_dim,), jnp.float32) * 0.1
        # Weights pre-split so kernels never need a wrapper-side concatenate.
        self.w_s = w[:state_dim].reshape(1, state_dim)
        self.w_a = w[state_dim:state_dim + action_dim].reshape(1, action_dim)
        self.w_ns = w[state_dim + action_dim:].reshape(1, state_dim)
        self.b = jnp.zeros((1,), jnp.float32)

    def _params(self):
        return self.w_s, self.w_a, self.w_ns, self.b

    # TODO(synk): source `forward` raises NotImplementedError (abstract base);
    # a minimal linear discriminator head is used here instead.
    def forward(self, states, actions, next_states):
        logits_row = _fused_forward(states, actions, next_states,
                                    *self._params(), label=None)    # [1, B]
        return logits_row.reshape(-1, 1)                            # [B, 1]

    def gan_loss(self, logits, labels):
        loss_row = _pallas_bce(jnp.reshape(logits, (1, -1)), labels)  # [1, B]
        return jnp.squeeze(loss_row)              # == torch.squeeze(loss.T)

    def utility(self, states, actions, predicted_next_states, labels):
        # forward + BCE fused into a single kernel (no logits HBM round-trip)
        loss_row = _fused_forward(states, actions, predicted_next_states,
                                  *self._params(), label=labels)
        loss = jnp.squeeze(loss_row)
        return jnp.reshape(loss, (1,)) if loss.ndim == 0 else loss

    def loss(self, states, actions, predicted_next_states, labels):
        return -1.0 * jnp.mean(
            self.utility(states, actions, predicted_next_states, labels))

    def d_loss(self, states, actions, next_states, predicted_next_states):
        # both forwards + per-example partials in one kernel; the shared
        # states/actions partial logit is computed once.
        loss, fraction_correct = _pallas_d_loss_stats(
            states, actions, next_states, predicted_next_states,
            *self._params())
        # TODO(synk): torch uses a data-dependent Python branch; jnp.where is
        # value-equivalent here because `loss` is always finite.
        return jnp.where(fraction_correct > self.threshold, loss, 0.0).reshape(1)


# ------------------------------ demo / smoke test ------------------------------

if __name__ == "__main__":
    key = jax.random.PRNGKey(0)
    k1, k2, k3, k4, kparam = jax.random.split(key, 5)

    # ---------------- small-shape primary check ----------------
    B, S, A = 8, 16, 4
    states = jax.random.normal(k1, (B, S), jnp.float32)
    actions = jax.random.normal(k2, (B, A), jnp.float32)
    next_states = jax.random.normal(k3, (B, S), jnp.float32)
    predicted_next_states = jax.random.normal(k4, (B, S), jnp.float32)

    disc = Discriminator(threshold=0.5, state_dim=S, action_dim=A, key=kparam)

    logits = disc.forward(states, actions, next_states)                  # [B,1]
    g_bce = disc.gan_loss(logits, 1.0)                                   # [B]
    util = disc.utility(states, actions, predicted_next_states, 1.0)     # [B]
    g_loss = disc.loss(states, actions, predicted_next_states, 0.0)      # scalar
    dl = disc.d_loss(states, actions, next_states, predicted_next_states)  # [1]
    jax.block_until_ready((logits, g_bce, util, g_loss, dl))

    # ---- pure-JAX reference ----
    w_row = jnp.concatenate([disc.w_s, disc.w_a, disc.w_ns], axis=1)     # [1,F]

    def ref_fwd(s, a, ns):
        x = jnp.concatenate([s, a, ns], axis=1).astype(jnp.float32)
        return (jnp.sum(x * w_row, axis=1, keepdims=True) + disc.b[0])

    def ref_bce(x, y):
        return jnp.maximum(x, 0.0) - x * y + jnp.log1p(jnp.exp(-jnp.abs(x)))

    def ref_d_loss(s, a, ns, pns, thr):
        lt = ref_fwd(s, a, ns)
        lg = ref_fwd(s, a, pns)
        l = jnp.mean(ref_bce(lg, 1.0)) + jnp.mean(ref_bce(lt, 0.0))
        frac = (jnp.sum(lg > 0.5) + jnp.sum(lt < 0.5)) / s.shape[0]
        return jnp.where(frac > thr, l, 0.0).reshape(1)

    lt_r = ref_fwd(states, actions, next_states)
    lg_r = ref_fwd(states, actions, predicted_next_states)
    np.testing.assert_allclose(np.asarray(logits), np.asarray(lt_r),
                               rtol=1e-4, atol=1e-5)
    np.testing.assert_allclose(np.asarray(g_bce),
                               np.asarray(jnp.squeeze(ref_bce(lt_r, 1.0).T)),
                               rtol=1e-4, atol=1e-5)
    np.testing.assert_allclose(np.asarray(util),
                               np.asarray(jnp.squeeze(ref_bce(lg_r, 1.0).T)),
                               rtol=1e-4, atol=1e-5)
    np.testing.assert_allclose(np.asarray(g_loss),
                               np.asarray(-jnp.mean(ref_bce(lg_r, 0.0))),
                               rtol=1e-4, atol=1e-5)
    np.testing.assert_allclose(
        np.asarray(dl),
        np.asarray(ref_d_loss(states, actions, next_states,
                              predicted_next_states, disc.threshold)),
        rtol=1e-4, atol=1e-5)

    # ---------------- gridded / padded path check ----------------
    # Large enough that every generation's byte-target forces >= 2 grid steps
    # and the batch is not a multiple of the tile (exercises padding + slice).
    B2 = 8269
    kb1, kb2, kb3, kb4 = jax.random.split(jax.random.PRNGKey(1), 4)
    s2 = jax.random.normal(kb1, (B2, S), jnp.float32)
    a2 = jax.random.normal(kb2, (B2, A), jnp.float32)
    ns2 = jax.random.normal(kb3, (B2, S), jnp.float32)
    pns2 = jax.random.normal(kb4, (B2, S), jnp.float32)

    util2 = disc.utility(s2, a2, pns2, 1.0)
    dl2 = disc.d_loss(s2, a2, ns2, pns2)
    jax.block_until_ready((util2, dl2))

    np.testing.assert_allclose(
        np.asarray(util2),
        np.asarray(jnp.squeeze(ref_bce(ref_fwd(s2, a2, pns2), 1.0).T)),
        rtol=1e-4, atol=1e-5)
    np.testing.assert_allclose(
        np.asarray(dl2),
        np.asarray(ref_d_loss(s2, a2, ns2, pns2, disc.threshold)),
        rtol=1e-4, atol=1e-3)

    # ---------------- bf16 pass-through (no wrapper upcast) ----------------
    util_bf16 = disc.utility(states.astype(jnp.bfloat16),
                             actions.astype(jnp.bfloat16),
                             predicted_next_states.astype(jnp.bfloat16), 1.0)
    jax.block_until_ready(util_bf16)
    np.testing.assert_allclose(np.asarray(util_bf16),
                               np.asarray(jnp.squeeze(ref_bce(lg_r, 1.0).T)),
                               rtol=3e-2, atol=3e-2)

    print("KERNEL_OK")
</pallas_src>

<mosaic_0001>
module attributes {stable_mosaic.version = 11 : i64} {
  func.func @_logits_kernel(%arg0: i32, %arg1: memref<8x16xf32, #tpu.memory_space<vmem>>, %arg2: memref<8x4xf32, #tpu.memory_space<vmem>>, %arg3: memref<8x16xf32, #tpu.memory_space<vmem>>, %arg4: memref<1x16xf32, #tpu.memory_space<vmem>>, %arg5: memref<1x4xf32, #tpu.memory_space<vmem>>, %arg6: memref<1x16xf32, #tpu.memory_space<vmem>>, %arg7: memref<1xf32, #tpu.memory_space<smem>>, %arg8: memref<1x8xf32, #tpu.memory_space<vmem>>) attributes {dimension_semantics = [#tpu.dimension_semantics<parallel>], iteration_bounds = array<i64: 1>, scalar_prefetch = 0 : i64, scratch_operands = 0 : i64, tpu.core_type = #tpu.core_type<tc>, window_params = [{transform_indices = @transform_0, window_bounds = array<i64: 8, 16>}, {transform_indices = @transform_1, window_bounds = array<i64: 8, 4>}, {transform_indices = @transform_2, window_bounds = array<i64: 8, 16>}, {pipeline_mode = #tpu.pipeline_mode<synchronous>, transform_indices = @transform_3, window_bounds = array<i64: 1, 16>}, {pipeline_mode = #tpu.pipeline_mode<synchronous>, transform_indices = @transform_4, window_bounds = array<i64: 1, 4>}, {pipeline_mode = #tpu.pipeline_mode<synchronous>, transform_indices = @transform_5, window_bounds = array<i64: 1, 16>}, {transform_indices = @transform_6, window_bounds = array<i64: 1>}, {transform_indices = @transform_7, window_bounds = array<i64: 1, 8>}]} {
    %c0 = arith.constant 0 : index
    %c0_0 = arith.constant 0 : index
    %0 = vector.load %arg1[%c0, %c0_0] : memref<8x16xf32, #tpu.memory_space<vmem>>, vector<8x16xf32>
    %c0_1 = arith.constant 0 : index
    %c0_2 = arith.constant 0 : index
    %1 = vector.load %arg2[%c0_1, %c0_2] : memref<8x4xf32, #tpu.memory_space<vmem>>, vector<8x4xf32>
    %c0_3 = arith.constant 0 : index
    %c0_4 = arith.constant 0 : index
    %2 = vector.load %arg3[%c0_3, %c0_4] : memref<8x16xf32, #tpu.memory_space<vmem>>, vector<8x16xf32>
    %c0_5 = arith.constant 0 : index
    %c0_6 = arith.constant 0 : index
    %3 = vector.load %arg4[%c0_5, %c0_6] : memref<1x16xf32, #tpu.memory_space<vmem>>, vector<1x16xf32>
    %4 = vector.broadcast %3 : vector<1x16xf32> to vector<8x16xf32>
    %5 = arith.mulf %0, %4 : vector<8x16xf32>
    %cst = arith.constant dense<0.000000e+00> : vector<8xf32>
    %6 = vector.multi_reduction <add>, %5, %cst [1] : vector<8x16xf32> to vector<8xf32>
    %c0_7 = arith.constant 0 : index
    %c0_8 = arith.constant 0 : index
    %7 = vector.load %arg5[%c0_7, %c0_8] : memref<1x4xf32, #tpu.memory_space<vmem>>, vector<1x4xf32>
    %8 = vector.broadcast %7 : vector<1x4xf32> to vector<8x4xf32>
    %9 = arith.mulf %1, %8 : vector<8x4xf32>
    %cst_9 = arith.constant dense<0.000000e+00> : vector<8xf32>
    %10 = vector.multi_reduction <add>, %9, %cst_9 [1] : vector<8x4xf32> to vector<8xf32>
    %11 = arith.addf %6, %10 : vector<8xf32>
    %c0_10 = arith.constant 0 : index
    %c0_11 = arith.constant 0 : index
    %12 = vector.load %arg6[%c0_10, %c0_11] : memref<1x16xf32, #tpu.memory_space<vmem>>, vector<1x16xf32>
    %13 = vector.broadcast %12 : vector<1x16xf32> to vector<8x16xf32>
    %14 = arith.mulf %2, %13 : vector<8x16xf32>
    %cst_12 = arith.constant dense<0.000000e+00> : vector<8xf32>
    %15 = vector.multi_reduction <add>, %14, %cst_12 [1] : vector<8x16xf32> to vector<8xf32>
    %16 = arith.addf %11, %15 : vector<8xf32>
    %c0_13 = arith.constant 0 : index
    %17 = memref.load %arg7[%c0_13] : memref<1xf32, #tpu.memory_space<smem>>
    %18 = vector.broadcast %17 : f32 to vector<8xf32>
    %19 = arith.addf %16, %18 : vector<8xf32>
    %20 = vector.shape_cast %19 : vector<8xf32> to vector<1x8xf32>
    %c0_14 = arith.constant 0 : index
    %c0_15 = arith.constant 0 : index
    %21 = vector.load %arg8[%c0_14, %c0_15] : memref<1x8xf32, #tpu.memory_space<vmem>>, vector<1x8xf32>
    tpu.vector_store %arg8[%c0_14, %c0_15], %20 {strides = array<i32>} : memref<1x8xf32, #tpu.memory_space<vmem>>, vector<1x8xf32>,
    return
  }
  func.func @transform_0(%arg0: i32) -> (i32, i32) {
    %c0_i32 = arith.constant 0 : i32
    %c0_i32_0 = arith.constant 0 : i32
    return %arg0, %c0_i32 : i32, i32
  }
  func.func @transform_1(%arg0: i32) -> (i32, i32) {
    %c0_i32 = arith.constant 0 : i32
    %c0_i32_0 = arith.constant 0 : i32
    return %arg0, %c0_i32 : i32, i32
  }
  func.func @transform_2(%arg0: i32) -> (i32, i32) {
    %c0_i32 = arith.constant 0 : i32
    %c0_i32_0 = arith.constant 0 : i32
    return %arg0, %c0_i32 : i32, i32
  }
  func.func @transform_3(%arg0: i32) -> (i32, i32) {
    %c0_i32 = arith.constant 0 : i32
    %c0_i32_0 = arith.constant 0 : i32
    %c0_i32_1 = arith.constant 0 : i32
    return %c0_i32, %c0_i32_0 : i32, i32
  }
  func.func @transform_4(%arg0: i32) -> (i32, i32) {
    %c0_i32 = arith.constant 0 : i32
    %c0_i32_0 = arith.constant 0 : i32
    %c0_i32_1 = arith.constant 0 : i32
    return %c0_i32, %c0_i32_0 : i32, i32
  }
  func.func @transform_5(%arg0: i32) -> (i32, i32) {
    %c0_i32 = arith.constant 0 : i32
    %c0_i32_0 = arith.constant 0 : i32
    %c0_i32_1 = arith.constant 0 : i32
    return %c0_i32, %c0_i32_0 : i32, i32
  }
  func.func @transform_6(%arg0: i32) -> i32 {
    %c0_i32 = arith.constant 0 : i32
    %c0_i32_0 = arith.constant 0 : i32
    return %c0_i32 : i32
  }
  func.func @transform_7(%arg0: i32) -> (i32, i32) {
    %c0_i32 = arith.constant 0 : i32
    %c0_i32_0 = arith.constant 0 : i32
    return %c0_i32, %arg0 : i32, i32
  }
}

</mosaic_0001>

<llo_original>
// kernel: tpu_custom_call.1
$region0: #{tpu_custom_call.1}
  #allocation0 [shape = 'u32[]', space=smem, size = 0x4, offset = 0x4, fixed_abs, tag = 'smem constant byte address 0x4 - core index']
  #allocation1 [shape = 'u32[144,128]{1,0:T(1,128)}', space=vmem, size = 0x12000, scoped, tag = 'internal scratch']
  #allocation2 [shape = 'f32[1]{0:T(128)S(6)}', space=smem, size = 0x200, scoped, tag = 'scoped memory for tpu_custom_call.1']
  %s0 = inlined_call_operand.vmem [shape: f32[8,16], index: 0, kind: input, shape index: {}]
  %s1 = inlined_call_operand.vmem [shape: f32[8,4], index: 1, kind: input, shape index: {}]
  %s2 = inlined_call_operand.vmem [shape: f32[8,16], index: 2, kind: input, shape index: {}]
  %s3 = inlined_call_operand.vmem [shape: f32[1,16], index: 3, kind: input, shape index: {}]
  %s4 = inlined_call_operand.vmem [shape: f32[1,4], index: 4, kind: input, shape index: {}]
  %s5 = inlined_call_operand.vmem [shape: f32[1,16], index: 5, kind: input, shape index: {}]
  %s6 = inlined_call_operand.<no memory space> [shape: f32[1], index: 6, kind: input, shape index: {}]
  %s7 = inlined_call_operand.hbm [shape: f32[1,8], index: 7, kind: output, shape index: {}]
  %s8 = sld [smem:[#allocation0]]
  $region38: #{tpu_custom_call.1} parent=0
    _
  %s10 = ssub.s32 1, %s8
  %s11 = scalar_select 0, %s10, %s8
  %12 = sst [smem:[#allocation2]] %s6
  $region1: #{tpu_custom_call.1} parent=0
    #allocation3 [shape = 'u8[512]{0}', space=vmem, size = 0x400, scoped, tag = 'output window, operand 0, single buffered']
    #allocation4 [shape = 's32[1]{0}', space=sflag, size = 0x4, scoped, tag = 'scoped memory for tpu_custom_call.1']
    %13 = vsyncpa [#allocation4], 0
    // Predicated region
    $region2: #{tpu_custom_call.1} parent=1 // pred_check
      _
    $region3: #{tpu_custom_call.1} parent=1 // pred_check_branch
      %15 = sbr.rel (0) target = $region5
    $region4: #{tpu_custom_call.1} parent=1 // pred_region
      _
    $region5: #{tpu_custom_call.1} parent=1 // pred_fallthru
      _
    // Predicated region
    $region6: #{tpu_custom_call.1} parent=1 // pred_check
      _
    $region7: #{tpu_custom_call.1} parent=1 // pred_check_branch
      %17 = sbr.rel (0) target = $region9
    $region8: #{tpu_custom_call.1} parent=1 // pred_region
      _
    $region9: #{tpu_custom_call.1} parent=1 // pred_fallthru
      _
    // Predicated region
    $region10: #{tpu_custom_call.1} parent=1 // pred_check
      _
    $region11: #{tpu_custom_call.1} parent=1 // pred_check_branch
      %19 = sbr.rel (0) target = $region13
    $region12: #{tpu_custom_call.1} parent=1 // pred_region
      _
    $region13: #{tpu_custom_call.1} parent=1 // pred_fallthru
      _
    // Predicated region
    $region14: #{tpu_custom_call.1} parent=1 // pred_check
      _
    $region15: #{tpu_custom_call.1} parent=1 // pred_check_branch
      %21 = sbr.rel (0) target = $region17
    $region16: #{tpu_custom_call.1} parent=1 // pred_region
      _
    $region17: #{tpu_custom_call.1} parent=1 // pred_fallthru
      _
    // Predicated region
    $region18: #{tpu_custom_call.1} parent=1 // pred_check
      _
    $region19: #{tpu_custom_call.1} parent=1 // pred_check_branch
      %23 = sbr.rel (0) target = $region21
    $region20: #{tpu_custom_call.1} parent=1 // pred_region
      _
    $region21: #{tpu_custom_call.1} parent=1 // pred_fallthru
      _
    // Predicated region
    $region22: #{tpu_custom_call.1} parent=1 // pred_check
      _
    $region23: #{tpu_custom_call.1} parent=1 // pred_check_branch
      %25 = sbr.rel (0) target = $region25
    $region24: #{tpu_custom_call.1} parent=1 // pred_region
      _
    $region25: #{tpu_custom_call.1} parent=1 // pred_fallthru
      _
    // Predicated region
    $region26: #{tpu_custom_call.1} parent=1 // pred_check
      _
    $region27: #{tpu_custom_call.1} parent=1 // pred_check_branch
      %27 = sbr.rel (0) target = $region29
    $region28: #{tpu_custom_call.1} parent=1 // pred_region
      _
    $region29: #{tpu_custom_call.1} parent=1 // pred_fallthru
      _
    %v28 = vld [vmem:[%s0] sm:$0xff]
    %v29 = vld [vmem:[%s1] sm:$0xff]
    %v30 = vld [vmem:[%s2] sm:$0xff]
    %v31 = vld [vmem:[%s3] sm:$0x1]
    %v33 = vlaneseq
    %v34 = vshrl.u32 %v33, 7
    %v35 = vsub.s32 0, %v34
    %v36 = vrot.slane %v31, %v35
    %v38 = vmul.f32 %v28, %v36
    %vm39 = vcmask 130048
    %v40 = vsel %vm39, %v38, 0.0
    %41 = vadd.xlane.f32.xlu0 %v40
    %v42 = vpop.xlane.xlu0 %41
    %v43 = vld [vmem:[%s4] sm:$0x1]
    %v45 = vlaneseq
    %v46 = vshrl.u32 %v45, 7
    %v47 = vsub.s32 0, %v46
    %v48 = vrot.slane %v43, %v47
    %v50 = vmul.f32 %v29, %v48
    %vm51 = vcmask 31744
    %v52 = vsel %vm51, %v50, 0.0
    %53 = vadd.xlane.f32.xlu0 %v52
    %v54 = vpop.xlane.xlu0 %53
    %v55 = vadd.f32 %v42, %v54
    %v56 = vld [vmem:[%s5] sm:$0x1]
    %v58 = vlaneseq
    %v59 = vshrl.u32 %v58, 7
    %v60 = vsub.s32 0, %v59
    %v61 = vrot.slane %v56, %v60
    %v63 = vmul.f32 %v30, %v61
    %v64 = vsel %vm39, %v63, 0.0
    %65 = vadd.xlane.f32.xlu0 %v64
    %v66 = vpop.xlane.xlu0 %65
    %v67 = vadd.f32 %v55, %v66
    %s68 = sld [smem:[#allocation2]]
    %v69 = vstv %s68
    %v70 = vadd.f32 %v67, %v69
    %v72 = vlaneseq
    %v73 = vand.u32 %v72, 127
    %v74 = vlaneseq
    %v75 = vshrl.u32 %v74, 7
    %v76 = vsub.s32 %v73, %v75
    %v77 = vrot.slane %v70, %v76
    %vm79 = vcmask 57344
    %80 = vst.msk [vmem:[#allocation3] sm:$0x1] %vm79, %v77
    // Predicated region
    $region30: #{tpu_custom_call.1} parent=1 // pred_check
      _
    $region31: #{tpu_custom_call.1} parent=1 // pred_check_branch
      %82 = sbr.rel (0) target = $region33
    $region32: #{tpu_custom_call.1} parent=1 // pred_region
      %s84 = ssub.s32 16, 16
      %85 = vsyncadd [#allocation4], %s84
      %s87 = sshll.u32 [#allocation3], 4
      %s88 = int_to_ptr.vmem [resolvable:$true] %s87
      %90 = dma.vmem_to_hbm [thread:$0]  %s88, 16, %s7, [#allocation4]
    $region33: #{tpu_custom_call.1} parent=1 // pred_fallthru
      _
    // Predicated region
    $region34: #{tpu_custom_call.1} parent=1 // pred_check
      _
    $region35: #{tpu_custom_call.1} parent=1 // pred_check_branch
      %92 = sbr.rel (0) target = $region37
    $region36: #{tpu_custom_call.1} parent=1 // pred_region
      %93 = dma.done [#allocation4], 16
    $region37: #{tpu_custom_call.1} parent=1 // pred_fallthru
      _
    %94 = vsyncpa [#allocation4], 1

</llo_original>
